<compile_context>
chip_gen: v7x
topology: tpu7x:2x2x1
jax: 0.10.0
libtpu: 0.0.40
codegen_flags: <defaults>
</compile_context>

<pallas_src>
import jax
import jax.numpy as jnp
from jax.experimental import pallas as pl
from jax.experimental.pallas import tpu as pltpu


def lstm_cell_kernel(xh_ref, c0_ref, w_ref, h1_ref, c1_ref):
    """xh_ref: (Bp, F+K)  c0_ref: (Bp, K)  w_ref: (F+K, 4K)  outputs: (Bp, K)."""
    K = c0_ref.shape[1]

    # One fused MXU matmul for all four gates.
    gates = jnp.dot(xh_ref[...], w_ref[...], preferred_element_type=jnp.float32)

    # Fused-slab activations: gate columns are laid out as [ i | f | o | g ].
    sig = jax.nn.sigmoid(gates[:, : 3 * K])   # i, f, o in one sigmoid
    g = jnp.tanh(gates[:, 3 * K:])            # g in one tanh

    i = sig[:, 0 * K:1 * K]
    f = sig[:, 1 * K:2 * K]
    o = sig[:, 2 * K:3 * K]

    c1 = f * c0_ref[...] + i * g
    h1 = o * jnp.tanh(c1)

    c1_ref[...] = c1.astype(c1_ref.dtype)
    h1_ref[...] = h1.astype(h1_ref.dtype)


def my_lstm_layer_forward(x, params, h0=None, c0=None):
    """Pallas forward of MyLSTMLayer. x: (B, F). Returns (h1, c1), each (B, K)."""
    B, F = x.shape
    K = params["weight_hi"].shape[0]
    if h0 is None:
        h0 = jnp.zeros((B, K), jnp.float32)
    if c0 is None:
        c0 = jnp.zeros((B, K), jnp.float32)

    # Fuse the 8 weight matrices: rows = [x ; h], cols = [ i | f | o | g ].
    wi = jnp.concatenate([params["weight_ii"], params["weight_if"],
                          params["weight_io"], params["weight_ig"]], axis=1)  # (F, 4K)
    wh = jnp.concatenate([params["weight_hi"], params["weight_hf"],
                          params["weight_ho"], params["weight_hg"]], axis=1)  # (K, 4K)
    w_fused = jnp.concatenate([wi, wh], axis=0)                               # (F+K, 4K)

    # Concatenate [x | h0] once, and pad batch to a multiple of 8 sublanes.
    xh = jnp.concatenate([x, h0], axis=1)                                     # (B, F+K)
    Bp = ((B + 7) // 8) * 8
    pad = Bp - B
    xh_p = jnp.pad(xh, ((0, pad), (0, 0)))
    c0_p = jnp.pad(c0, ((0, pad), (0, 0)))

    vmem = pl.BlockSpec(memory_space=pltpu.MemorySpace.VMEM)
    h1_p, c1_p = pl.pallas_call(
        lstm_cell_kernel,
        out_shape=(jax.ShapeDtypeStruct((Bp, K), jnp.float32),
                   jax.ShapeDtypeStruct((Bp, K), jnp.float32)),
        in_specs=[vmem, vmem, vmem],
        out_specs=(vmem, vmem),
    )(xh_p, c0_p, w_fused)

    return h1_p[:B], c1_p[:B]


def my_lstm_layer_reference(x, params, h0=None, c0=None):
    """Pure-JAX reference mirroring the PyTorch forward exactly (8 matmuls)."""
    B = x.shape[0]
    K = params["weight_hi"].shape[0]
    if h0 is None:
        h0 = jnp.zeros((B, K), jnp.float32)
    if c0 is None:
        c0 = jnp.zeros((B, K), jnp.float32)
    i = jax.nn.sigmoid(x @ params["weight_ii"] + h0 @ params["weight_hi"])
    f = jax.nn.sigmoid(x @ params["weight_if"] + h0 @ params["weight_hf"])
    g = jnp.tanh(x @ params["weight_ig"] + h0 @ params["weight_hg"])
    o = jax.nn.sigmoid(x @ params["weight_io"] + h0 @ params["weight_ho"])
    c1 = f * c0 + i * g
    h1 = o * jnp.tanh(c1)
    return h1, c1


def init_params(key, input_size, hidden_size):
    """randn weights, same shapes as the module's __init__ (no biases)."""
    keys = jax.random.split(key, 8)
    names = ["weight_ii", "weight_if", "weight_ig", "weight_io",
             "weight_hi", "weight_hf", "weight_hg", "weight_ho"]
    shapes = [(input_size, hidden_size)] * 4 + [(hidden_size, hidden_size)] * 4
    return {n: jax.random.normal(k, s, jnp.float32)
            for n, k, s in zip(names, keys, shapes)}


if __name__ == "__main__":
    input_size, hidden = 9, 64     # e.g. copy-task input m+1 = 9, hidden_size = 64
    B = 4

    key = jax.random.PRNGKey(0)
    pkey, xkey, hkey, ckey = jax.random.split(key, 4)
    params = init_params(pkey, input_size, hidden)
    x = jax.random.normal(xkey, (B, input_size), jnp.float32)

    fwd = jax.jit(my_lstm_layer_forward)

    # 1) default zero initial state (the module's default path)
    h1, c1 = jax.block_until_ready(fwd(x, params))
    h1_ref, c1_ref = my_lstm_layer_reference(x, params)
    assert h1.shape == (B, hidden) and c1.shape == (B, hidden)
    assert jnp.allclose(h1, h1_ref, atol=5e-4, rtol=5e-4), "h1 mismatch (zero state)"
    assert jnp.allclose(c1, c1_ref, atol=5e-4, rtol=5e-4), "c1 mismatch (zero state)"

    # 2) explicit (h_0, c_0) to exercise the hidden-weight half of the fused matmul
    h0 = jnp.tanh(jax.random.normal(hkey, (B, hidden), jnp.float32))
    c0 = 0.5 * jax.random.normal(ckey, (B, hidden), jnp.float32)
    h1b, c1b = jax.block_until_ready(fwd(x, params, h0, c0))
    h1b_ref, c1b_ref = my_lstm_layer_reference(x, params, h0, c0)
    assert jnp.allclose(h1b, h1b_ref, atol=5e-4, rtol=5e-4), "h1 mismatch (explicit state)"
    assert jnp.allclose(c1b, c1b_ref, atol=5e-4, rtol=5e-4), "c1 mismatch (explicit state)"

    print("KERNEL_OK")
</pallas_src>

<mosaic_0001>
module attributes {stable_mosaic.version = 11 : i64} {
  func.func @lstm_cell_kernel(%arg0: memref<8x73xf32, #tpu.memory_space<vmem>>, %arg1: memref<8x64xf32, #tpu.memory_space<vmem>>, %arg2: memref<73x256xf32, #tpu.memory_space<vmem>>, %arg3: memref<8x64xf32, #tpu.memory_space<vmem>>, %arg4: memref<8x64xf32, #tpu.memory_space<vmem>>) attributes {dimension_semantics = [], scalar_prefetch = 0 : i64, scratch_operands = 0 : i64, tpu.core_type = #tpu.core_type<tc>} {
    %c0 = arith.constant 0 : index
    %c0_0 = arith.constant 0 : index
    %0 = vector.load %arg0[%c0, %c0_0] : memref<8x73xf32, #tpu.memory_space<vmem>>, vector<8x73xf32>
    %c0_1 = arith.constant 0 : index
    %c0_2 = arith.constant 0 : index
    %1 = vector.load %arg2[%c0_1, %c0_2] : memref<73x256xf32, #tpu.memory_space<vmem>>, vector<73x256xf32>
    %cst = arith.constant dense<0.000000e+00> : vector<8x256xf32>
    %2 = tpu.matmul %0, %1, %cst {dimension_numbers = #tpu.dot_dimension_numbers<[1], [0], [0], [1], [0, 0, 1, 1], [], []>} : vector<8x73xf32>, vector<73x256xf32>, vector<8x256xf32> -> vector<8x256xf32>
    %3 = vector.extract_strided_slice %2 {offsets = [0, 0], sizes = [8, 192], strides = [1, 1]} : vector<8x256xf32> to vector<8x192xf32>
    %4 = arith.negf %3 : vector<8x192xf32>
    %5 = math.exp %4 : vector<8x192xf32>
    %cst_3 = arith.constant 1.000000e+00 : f32
    %6 = vector.broadcast %cst_3 : f32 to vector<8x192xf32>
    %7 = arith.addf %6, %5 : vector<8x192xf32>
    %8 = arith.divf %6, %7 : vector<8x192xf32>
    %9 = vector.extract_strided_slice %2 {offsets = [0, 192], sizes = [8, 64], strides = [1, 1]} : vector<8x256xf32> to vector<8x64xf32>
    %10 = math.tanh %9 : vector<8x64xf32>
    %11 = vector.extract_strided_slice %8 {offsets = [0, 0], sizes = [8, 64], strides = [1, 1]} : vector<8x192xf32> to vector<8x64xf32>
    %12 = vector.extract_strided_slice %8 {offsets = [0, 64], sizes = [8, 64], strides = [1, 1]} : vector<8x192xf32> to vector<8x64xf32>
    %13 = vector.extract_strided_slice %8 {offsets = [0, 128], sizes = [8, 64], strides = [1, 1]} : vector<8x192xf32> to vector<8x64xf32>
    %c0_4 = arith.constant 0 : index
    %c0_5 = arith.constant 0 : index
    %14 = vector.load %arg1[%c0_4, %c0_5] : memref<8x64xf32, #tpu.memory_space<vmem>>, vector<8x64xf32>
    %15 = arith.mulf %12, %14 : vector<8x64xf32>
    %16 = arith.mulf %11, %10 : vector<8x64xf32>
    %17 = arith.addf %15, %16 : vector<8x64xf32>
    %18 = math.tanh %17 : vector<8x64xf32>
    %19 = arith.mulf %13, %18 : vector<8x64xf32>
    %c0_6 = arith.constant 0 : index
    %c0_7 = arith.constant 0 : index
    %20 = vector.load %arg4[%c0_6, %c0_7] : memref<8x64xf32, #tpu.memory_space<vmem>>, vector<8x64xf32>
    tpu.vector_store %arg4[%c0_6, %c0_7], %17 {strides = array<i32>} : memref<8x64xf32, #tpu.memory_space<vmem>>, vector<8x64xf32>,
    %c0_8 = arith.constant 0 : index
    %c0_9 = arith.constant 0 : index
    %21 = vector.load %arg3[%c0_8, %c0_9] : memref<8x64xf32, #tpu.memory_space<vmem>>, vector<8x64xf32>
    tpu.vector_store %arg3[%c0_8, %c0_9], %19 {strides = array<i32>} : memref<8x64xf32, #tpu.memory_space<vmem>>, vector<8x64xf32>,
    return
  }
}

</mosaic_0001>

<llo_original>
// kernel: my_lstm_layer_forward.1
$region0: #{my_lstm_layer_forward.1}
  #allocation0 [shape = 'u32[]', space=smem, size = 0x4, offset = 0x4, fixed_abs, tag = 'smem constant byte address 0x4 - core index']
  #allocation1 [shape = 'u32[144,128]{1,0:T(1,128)}', space=vmem, size = 0x12000, scoped, tag = 'internal scratch']
  %s0 = inlined_call_operand.vmem [shape: f32[8,73], index: 0, kind: input, shape index: {}]
  %s1 = inlined_call_operand.vmem [shape: f32[8,64], index: 1, kind: input, shape index: {}]
  %s2 = inlined_call_operand.vmem [shape: f32[73,256], index: 2, kind: input, shape index: {}]
  %s3 = inlined_call_operand.vmem [shape: f32[8,64], index: 3, kind: output, shape index: {0}]
  %s4 = inlined_call_operand.vmem [shape: f32[8,64], index: 4, kind: output, shape index: {1}]
  %5 = xla_tuple %s3, %s4
  %s6 = sld [smem:[#allocation0]]
  $region30: #{my_lstm_layer_forward.1} parent=0
    _
  %s8 = ssub.s32 1, %s6
  %s9 = scalar_select 0, %s8, %s6
  // Predicated region
  $region2: #{my_lstm_layer_forward.1} parent=0 // pred_check
    _
  $region3: #{my_lstm_layer_forward.1} parent=0 // pred_check_branch
    %11 = sbr.rel (0) target = $region5
  $region4: #{my_lstm_layer_forward.1} parent=0 // pred_region
    _
  $region5: #{my_lstm_layer_forward.1} parent=0 // pred_fallthru
    _
  // Predicated region
  $region6: #{my_lstm_layer_forward.1} parent=0 // pred_check
    _
  $region7: #{my_lstm_layer_forward.1} parent=0 // pred_check_branch
    %13 = sbr.rel (0) target = $region9
  $region8: #{my_lstm_layer_forward.1} parent=0 // pred_region
    _
  $region9: #{my_lstm_layer_forward.1} parent=0 // pred_fallthru
    _
  // Predicated region
  $region10: #{my_lstm_layer_forward.1} parent=0 // pred_check
    _
  $region11: #{my_lstm_layer_forward.1} parent=0 // pred_check_branch
    %15 = sbr.rel (0) target = $region13
  $region12: #{my_lstm_layer_forward.1} parent=0 // pred_region
    _
  $region13: #{my_lstm_layer_forward.1} parent=0 // pred_fallthru
    _
  %v16 = vld [vmem:[%s0] sm:$0xff]
  %v17 = vld [vmem:[%s2] sm:$0xff]
  %v18 = vld [vmem:[%s2 + $0x8] sm:$0xff]
  %v19 = vld [vmem:[%s2 + $0x10] sm:$0xff]
  %v20 = vld [vmem:[%s2 + $0x18] sm:$0xff]
  %v21 = vld [vmem:[%s2 + $0x20] sm:$0xff]
  %v22 = vld [vmem:[%s2 + $0x28] sm:$0xff]
  %v23 = vld [vmem:[%s2 + $0x30] sm:$0xff]
  %v24 = vld [vmem:[%s2 + $0x38] sm:$0xff]
  %v25 = vld [vmem:[%s2 + $0x40] sm:$0xff]
  %v26 = vld [vmem:[%s2 + $0x48] sm:$0xff]
  %v27 = vld [vmem:[%s2 + $0x50] sm:$0xff]
  %v28 = vld [vmem:[%s2 + $0x58] sm:$0xff]
  %v29 = vld [vmem:[%s2 + $0x60] sm:$0xff]
  %v30 = vld [vmem:[%s2 + $0x68] sm:$0xff]
  %v31 = vld [vmem:[%s2 + $0x70] sm:$0xff]
  %v32 = vld [vmem:[%s2 + $0x78] sm:$0xff]
  %v33 = vld [vmem:[%s2 + $0x80] sm:$0xff]
  %v34 = vld [vmem:[%s2 + $0x88] sm:$0xff]
  %v35 = vld [vmem:[%s2 + $0x90] sm:$0x1]
  %v36 = vld [vmem:[%s2 + $0x98] sm:$0x1]
  %vm37 = vcmask 596992
  %v39 = vsel %vm37, %v16, 0
  %vm41 = vcmask 1040384
  %v43 = vsel %vm41, %v35, 0
  %v46 = vsel %vm41, %v36, 0
  %48 = vmatprep.subr.mxu0 %v18
  %49 = vmatpush1.msra.mxu0 %v17
  %50 = vmatprep.subr.mxu0 %v20
  %51 = vmatpush1.msra.mxu0 %v19
  %52 = vmatprep.subr.mxu0 %v22
  %53 = vmatpush1.msra.mxu0 %v21
  %54 = vmatprep.subr.mxu0 %v24
  %55 = vmatpush1.msra.mxu0 %v23
  %56 = vmatprep.subr.mxu0 %v26
  %57 = vmatpush1.msra.mxu0 %v25
  %58 = vmatprep.subr.mxu0 %v28
  %59 = vmatpush1.msra.mxu0 %v27
  %60 = vmatprep.subr.mxu0 %v30
  %61 = vmatpush1.msra.mxu0 %v29
  %62 = vmatprep.subr.mxu0 %v32
  %63 = vmatpush1.msra.mxu0 %v31
  %64 = vmatprep.subr.mxu0 %v34
  %65 = vmatpush1.msra.mxu0 %v33
  %66 = vmatprep.subr.mxu0 %v46
  %67 = vmatpush1.msra.mxu0 %v43
  %68 = vmatprep.subr.mxu0 0.0
  %69 = vmatpush1.msra.mxu0 0.0
  %70 = vmatprep.subr.mxu0 0.0
  %71 = vmatpush1.msra.mxu0 0.0
  %72 = vmatprep.subr.mxu0 0.0
  %73 = vmatpush1.msra.mxu0 0.0
  %74 = vmatprep.subr.mxu0 0.0
  %75 = vmatpush1.msra.mxu0 0.0
  %76 = vmatprep.subr.mxu0 0.0
  %77 = vmatpush1.msra.mxu0 0.0
  %78 = vmatprep.subr.mxu0 0.0
  %79 = vmatpush1.msra.mxu0 0.0
  %80 = vmatprep.subr.mxu0 0.0
  %81 = vmatpush1.msra.mxu0 0.0
  %82 = vmatprep.subr.mxu0 0.0
  %83 = vmatpush1.msra.mxu0 0.0
  %84 = vmatprep.subr.mxu0 0.0
  %85 = vmatpush1.msra.mxu0 0.0
  %86 = vmatprep.subr.mxu0 0.0
  %87 = vmatpush1.msra.mxu0 0.0
  %88 = vmatprep.subr.mxu0 0.0
  %89 = vmatpush1.msra.mxu0 0.0
  %90 = vmatprep.subr.mxu0 0.0
  %91 = vmatpush1.msra.mxu0 0.0
  %92 = vmatprep.subr.mxu0 0.0
  %93 = vmatpush1.msra.mxu0 0.0
  %94 = vmatprep.subr.mxu0 0.0
  %95 = vmatpush1.msra.mxu0 0.0
  %96 = vmatprep.subr.mxu0 0.0
  %97 = vmatpush1.msra.mxu0 0.0
  %98 = vmatprep.subr.mxu0 0.0
  %99 = vmatpush1.msra.mxu0 0.0
  %100 = vmatprep.subr.mxu0 0.0
  %101 = vmatpush1.msra.mxu0 0.0
  %102 = vmatprep.subr.mxu0 0.0
  %103 = vmatpush1.msra.mxu0 0.0
  %104 = vmatprep.subr.mxu0 0.0
  %105 = vmatpush1.msra.mxu0 0.0
  %106 = vmatprep.subr.mxu0 0.0
  %107 = vmatpush1.msra.mxu0 0.0
  %108 = vmatprep.subr.mxu0 0.0
  %109 = vmatpush1.msra.mxu0 0.0
  %110 = vmatprep.subr.mxu0 0.0
  %111 = vmatpush1.msra.mxu0 0.0
  %112 = vmatprep.mubr.f32.mxu0 0.0
  %113 = vmatmul.mubr.f32.gmra.mrb[0].mxu0 %v39
  %v114 = vpop.f32.mrb[0].mxu0
  %v115 = vadd.f32 0.0, %v114
  %v116 = vpop.f32.mrb[0].mxu0
  %v117 = vadd.f32 0.0, %v116
  %118 = vdwg.mxu0
  %v119 = vxor.u32 %v115, 2147483648
  %v120 = vxor.u32 %v117, 2147483648
  %v121 = vmul.f32 %v119, 1.442695
  %v122 = vpow.pop %v121
  %v123 = vmul.f32 %v120, 1.442695
  %v124 = vpow.pop %v123
  %v125 = vadd.f32 %v122, 1.0
  %v126 = vadd.f32 %v124, 1.0
  %v127 = vrcp.pop %v125
  %v128 = vmul.f32 1.0, %v127
  %v129 = vrcp.pop %v126
  %v130 = vmul.f32 1.0, %v129
  %v131 = vtanh.pop %v117
  %v132 = vld [vmem:[%s1] sm:$0xff]
  %134 = vrot.lane.b32.xlu0 %v132, 64
  %v135 = vpop.permute.xlu0 %134
  %v137 = vmul.f32 %v128, %v135
  %139 = vrot.lane.b32.xlu0 %v131, 64
  %v140 = vpop.permute.xlu0 %139
  %v142 = vmul.f32 %v128, %v140
  %144 = vrot.lane.b32.xlu0 %v142, 64
  %v145 = vpop.permute.xlu0 %144
  %v147 = vadd.f32 %v137, %v145
  %v148 = vtanh.pop %v147
  %150 = vrot.lane.b32.xlu0 %v148, 64
  %v151 = vpop.permute.xlu0 %150
  %v153 = vmul.f32 %v130, %v151
  %155 = vrot.lane.b32.xlu0 %v147, 64
  %v156 = vpop.permute.xlu0 %155
  %vm158 = vcmask 523264
  %159 = vst.msk [vmem:[%s4] sm:$0xff] %vm158, %v156
  %160 = vst.msk [vmem:[%s3] sm:$0xff] %vm158, %v153
  // Predicated region
  $region14: #{my_lstm_layer_forward.1} parent=0 // pred_check
    _
  $region15: #{my_lstm_layer_forward.1} parent=0 // pred_check_branch
    %162 = sbr.rel (0) target = $region17
  $region16: #{my_lstm_layer_forward.1} parent=0 // pred_region
    _
  $region17: #{my_lstm_layer_forward.1} parent=0 // pred_fallthru
    _
  // Predicated region
  $region18: #{my_lstm_layer_forward.1} parent=0 // pred_check
    _
  $region19: #{my_lstm_layer_forward.1} parent=0 // pred_check_branch
    %164 = sbr.rel (0) target = $region21
  $region20: #{my_lstm_layer_forward.1} parent=0 // pred_region
    _
  $region21: #{my_lstm_layer_forward.1} parent=0 // pred_fallthru
    _
  // Predicated region
  $region22: #{my_lstm_layer_forward.1} parent=0 // pred_check
    _
  $region23: #{my_lstm_layer_forward.1} parent=0 // pred_check_branch
    %166 = sbr.rel (0) target = $region25
  $region24: #{my_lstm_layer_forward.1} parent=0 // pred_region
    _
  $region25: #{my_lstm_layer_forward.1} parent=0 // pred_fallthru
    _
  // Predicated region
  $region26: #{my_lstm_layer_forward.1} parent=0 // pred_check
    _
  $region27: #{my_lstm_layer_forward.1} parent=0 // pred_check_branch
    %168 = sbr.rel (0) target = $region29
  $region28: #{my_lstm_layer_forward.1} parent=0 // pred_region
    _
  $region29: #{my_lstm_layer_forward.1} parent=0 // pred_fallthru
    _

</llo_original>
